<compile_context>
chip_gen: v6e
topology: v6e:2x2x1
jax: 0.10.0
libtpu: 0.0.40
codegen_flags: <defaults>
</compile_context>

<pallas_src>
import functools

import jax
import jax.numpy as jnp
from jax.experimental import pallas as pl
from jax.experimental.pallas import tpu as pltpu

_LANE = 128  # lane (last-dim) alignment for the stacked weights


def _round_up(n, m):
    return ((n + m - 1) // m) * m


def _mlp_fused_kernel(num_layers, input_size, n_last, x_ref, w_ref, b_ref, o_ref):
    """Entire MLP in one kernel body.

    x_ref : (batch, input_size)  f32   logical shape (full-array block)
    w_ref : (L, P, P)            f32   stacked, zero-padded, pre-transposed weights
    b_ref : (L, 1, P)            f32   stacked, zero-padded biases
    o_ref : (batch, n_last)      f32   logical shape (full-array block)
    """
    cur = x_ref[...]                               # (batch, K0)
    for i in range(num_layers):                    # static unroll (small L)
        w = w_ref[i]                               # (P, P)
        if i == 0:
            # Only the real K rows of layer 0; rows >= input_size are zero pad.
            w = w[:input_size, :]                  # (input_size, P)
        y = jnp.dot(cur, w, preferred_element_type=jnp.float32)
        # bias-add + ReLU fused; padded columns stay exactly zero.
        cur = jnp.maximum(y + b_ref[i], 0.0)       # (batch, P)
    # Store only the real output columns (logical-shape output, no wrapper slice).
    o_ref[...] = cur[:, :n_last].astype(o_ref.dtype)


def make_mlp_forward(input_size, hidden_sizes, dtype=jnp.float32):
    """Build a jitted forward(x, w_stacked, b_stacked): exactly one pallas_call."""
    num_layers = len(hidden_sizes)
    n_last = hidden_sizes[-1]
    sizes = [input_size] + list(hidden_sizes)
    flops_per_row = sum(2 * sizes[i] * sizes[i + 1] for i in range(num_layers))

    kernel = functools.partial(_mlp_fused_kernel, num_layers, input_size, n_last)

    # TODO(synk): for large batch on v7x, add a batch grid axis with
    # dimension_semantics=("parallel",) to use the second TensorCore.
    @jax.jit
    def forward(x, w_stacked, b_stacked):
        batch = x.shape[0]
        flops = flops_per_row * batch
        bytes_accessed = 4 * (x.size + w_stacked.size + b_stacked.size
                              + batch * n_last)
        return pl.pallas_call(
            kernel,
            out_shape=jax.ShapeDtypeStruct((batch, n_last), dtype),
            # Whole-array VMEM residency, no grid: everything fits comfortably.
            in_specs=[pl.BlockSpec(memory_space=pltpu.MemorySpace.VMEM)] * 3,
            out_specs=pl.BlockSpec(memory_space=pltpu.MemorySpace.VMEM),
            compiler_params=pltpu.CompilerParams(
                vmem_limit_bytes=32 * 1024 * 1024,  # well inside v7x 64 MiB
            ),
            cost_estimate=pl.CostEstimate(flops=flops, transcendentals=0,
                                          bytes_accessed=bytes_accessed),
        )(x, w_stacked, b_stacked)

    return forward


def init_mlp_params(key, input_size, hidden_sizes, dtype=jnp.float32):
    """Deterministic init mirroring nn.Linear shapes.
    Layer i: weight (in_i, out_i) [already transposed], bias (out_i,)."""
    sizes = [input_size] + list(hidden_sizes)
    params = []
    for i in range(len(hidden_sizes)):
        fan_in, fan_out = sizes[i], sizes[i + 1]
        key, kw, kb = jax.random.split(key, 3)
        bound = 1.0 / jnp.sqrt(jnp.asarray(fan_in, dtype))
        w = jax.random.uniform(kw, (fan_in, fan_out), dtype, -bound, bound)
        b = jax.random.uniform(kb, (fan_out,), dtype, -bound, bound)
        params.append((w, b))
    return params


def stack_params(params, input_size, dtype=jnp.float32):
    """One-time zero-pad + stack of all layer weights/biases.

    Returns:
      w_stacked: (L, P, P)  with layer i's (K_i, N_i) weight in the top-left.
      b_stacked: (L, 1, P)  with layer i's bias in the first N_i lanes.
    """
    num_layers = len(params)
    dims = [input_size] + [int(w.shape[1]) for w, _ in params]
    p = _round_up(max(dims), _LANE)
    w_stacked = jnp.zeros((num_layers, p, p), dtype)
    b_stacked = jnp.zeros((num_layers, 1, p), dtype)
    for i, (w, b) in enumerate(params):
        k, n = w.shape
        w_stacked = w_stacked.at[i, :k, :n].set(w.astype(dtype))
        b_stacked = b_stacked.at[i, 0, :n].set(b.astype(dtype))
    return w_stacked, b_stacked


def mlp_reference(x, params):
    """Pure-JAX reference on the original (unpadded) shapes."""
    for w, b in params:
        x = jnp.maximum(x @ w + b, 0.0)
    return x


if __name__ == "__main__":
    key = jax.random.PRNGKey(0)
    batch = 2
    input_size = 16
    hidden_sizes = [32, 64, 32]

    kx, kp = jax.random.split(key)
    x = jax.random.normal(kx, (batch, input_size), dtype=jnp.float32)
    params = init_mlp_params(kp, input_size, hidden_sizes)
    w_stacked, b_stacked = stack_params(params, input_size)   # hoisted, one-time

    forward = make_mlp_forward(input_size, hidden_sizes)
    out = jax.block_until_ready(forward(x, w_stacked, b_stacked))

    ref = mlp_reference(x, params)
    assert out.shape == (batch, hidden_sizes[-1])
    assert jnp.allclose(out, ref, atol=1e-5, rtol=1e-5)

    print("KERNEL_OK")
</pallas_src>

<mosaic_0001>
module attributes {stable_mosaic.version = 11 : i64} {
  func.func @_mlp_fused_kernel(%arg0: memref<2x16xf32, #tpu.memory_space<vmem>>, %arg1: memref<3x128x128xf32, #tpu.memory_space<vmem>>, %arg2: memref<3x1x128xf32, #tpu.memory_space<vmem>>, %arg3: memref<2x32xf32, #tpu.memory_space<vmem>>) attributes {dimension_semantics = [], scalar_prefetch = 0 : i64, scratch_operands = 0 : i64, tpu.core_type = #tpu.core_type<tc>} {
    %c0 = arith.constant 0 : index
    %c0_0 = arith.constant 0 : index
    %0 = vector.load %arg0[%c0, %c0_0] : memref<2x16xf32, #tpu.memory_space<vmem>>, vector<2x16xf32>
    %c0_1 = arith.constant 0 : index
    %c0_2 = arith.constant 0 : index
    %c0_3 = arith.constant 0 : index
    %1 = vector.load %arg1[%c0_1, %c0_2, %c0_3] : memref<3x128x128xf32, #tpu.memory_space<vmem>>, vector<1x128x128xf32>
    %2 = vector.shape_cast %1 : vector<1x128x128xf32> to vector<128x128xf32>
    %3 = vector.extract_strided_slice %2 {offsets = [0, 0], sizes = [16, 128], strides = [1, 1]} : vector<128x128xf32> to vector<16x128xf32>
    %cst = arith.constant dense<0.000000e+00> : vector<2x128xf32>
    %4 = tpu.matmul %0, %3, %cst {dimension_numbers = #tpu.dot_dimension_numbers<[1], [0], [0], [1], [0, 0, 1, 1], [], []>} : vector<2x16xf32>, vector<16x128xf32>, vector<2x128xf32> -> vector<2x128xf32>
    %c0_4 = arith.constant 0 : index
    %c0_5 = arith.constant 0 : index
    %c0_6 = arith.constant 0 : index
    %5 = vector.load %arg2[%c0_4, %c0_5, %c0_6] : memref<3x1x128xf32, #tpu.memory_space<vmem>>, vector<1x1x128xf32>
    %6 = vector.shape_cast %5 : vector<1x1x128xf32> to vector<1x128xf32>
    %7 = vector.broadcast %6 : vector<1x128xf32> to vector<2x128xf32>
    %8 = arith.addf %4, %7 : vector<2x128xf32>
    %cst_7 = arith.constant 0.000000e+00 : f32
    %9 = vector.broadcast %cst_7 : f32 to vector<2x128xf32>
    %10 = arith.maximumf %8, %9 : vector<2x128xf32>
    %c1 = arith.constant 1 : index
    %c0_8 = arith.constant 0 : index
    %c0_9 = arith.constant 0 : index
    %11 = vector.load %arg1[%c1, %c0_8, %c0_9] : memref<3x128x128xf32, #tpu.memory_space<vmem>>, vector<1x128x128xf32>
    %12 = vector.shape_cast %11 : vector<1x128x128xf32> to vector<128x128xf32>
    %cst_10 = arith.constant dense<0.000000e+00> : vector<2x128xf32>
    %13 = tpu.matmul %10, %12, %cst_10 {dimension_numbers = #tpu.dot_dimension_numbers<[1], [0], [0], [1], [0, 0, 1, 1], [], []>} : vector<2x128xf32>, vector<128x128xf32>, vector<2x128xf32> -> vector<2x128xf32>
    %c1_11 = arith.constant 1 : index
    %c0_12 = arith.constant 0 : index
    %c0_13 = arith.constant 0 : index
    %14 = vector.load %arg2[%c1_11, %c0_12, %c0_13] : memref<3x1x128xf32, #tpu.memory_space<vmem>>, vector<1x1x128xf32>
    %15 = vector.shape_cast %14 : vector<1x1x128xf32> to vector<1x128xf32>
    %16 = vector.broadcast %15 : vector<1x128xf32> to vector<2x128xf32>
    %17 = arith.addf %13, %16 : vector<2x128xf32>
    %cst_14 = arith.constant 0.000000e+00 : f32
    %18 = vector.broadcast %cst_14 : f32 to vector<2x128xf32>
    %19 = arith.maximumf %17, %18 : vector<2x128xf32>
    %c2 = arith.constant 2 : index
    %c0_15 = arith.constant 0 : index
    %c0_16 = arith.constant 0 : index
    %20 = vector.load %arg1[%c2, %c0_15, %c0_16] : memref<3x128x128xf32, #tpu.memory_space<vmem>>, vector<1x128x128xf32>
    %21 = vector.shape_cast %20 : vector<1x128x128xf32> to vector<128x128xf32>
    %cst_17 = arith.constant dense<0.000000e+00> : vector<2x128xf32>
    %22 = tpu.matmul %19, %21, %cst_17 {dimension_numbers = #tpu.dot_dimension_numbers<[1], [0], [0], [1], [0, 0, 1, 1], [], []>} : vector<2x128xf32>, vector<128x128xf32>, vector<2x128xf32> -> vector<2x128xf32>
    %c2_18 = arith.constant 2 : index
    %c0_19 = arith.constant 0 : index
    %c0_20 = arith.constant 0 : index
    %23 = vector.load %arg2[%c2_18, %c0_19, %c0_20] : memref<3x1x128xf32, #tpu.memory_space<vmem>>, vector<1x1x128xf32>
    %24 = vector.shape_cast %23 : vector<1x1x128xf32> to vector<1x128xf32>
    %25 = vector.broadcast %24 : vector<1x128xf32> to vector<2x128xf32>
    %26 = arith.addf %22, %25 : vector<2x128xf32>
    %cst_21 = arith.constant 0.000000e+00 : f32
    %27 = vector.broadcast %cst_21 : f32 to vector<2x128xf32>
    %28 = arith.maximumf %26, %27 : vector<2x128xf32>
    %29 = vector.extract_strided_slice %28 {offsets = [0, 0], sizes = [2, 32], strides = [1, 1]} : vector<2x128xf32> to vector<2x32xf32>
    %c0_22 = arith.constant 0 : index
    %c0_23 = arith.constant 0 : index
    %30 = vector.load %arg3[%c0_22, %c0_23] : memref<2x32xf32, #tpu.memory_space<vmem>>, vector<2x32xf32>
    tpu.vector_store %arg3[%c0_22, %c0_23], %29 {strides = array<i32>} : memref<2x32xf32, #tpu.memory_space<vmem>>, vector<2x32xf32>,
    return
  }
}

</mosaic_0001>

<llo_original>
// kernel: forward.1
$region0: #{forward.1}
  #allocation0 [shape = 'u32[]', space=smem, size = 0x4, offset = 0x4, fixed_abs, tag = 'smem constant byte address 0x4 - core index']
  #allocation1 [shape = 'u32[144,128]{1,0:T(1,128)}', space=vmem, size = 0x12000, scoped, tag = 'internal scratch']
  %s0 = inlined_call_operand.hbm [shape: f32[2,16], index: 0, kind: input, shape index: {}]
  %s1 = inlined_call_operand.hbm [shape: f32[3,128,128], index: 1, kind: input, shape index: {}]
  %s2 = inlined_call_operand.vmem [shape: f32[3,1,128], index: 2, kind: input, shape index: {}]
  %s3 = inlined_call_operand.hbm [shape: f32[2,32], index: 3, kind: output, shape index: {}]
  %s4 = sld [smem:[#allocation0]]
  $region30: #{forward.1} parent=0
    _
  %s6 = ssub.s32 1, %s4
  %s7 = scalar_select 0, %s6, %s4
  $region1: #{forward.1} parent=0
    #allocation2 [shape = 'u8[1024]{0}', space=vmem, size = 0x400, scoped, tag = 'input window, operand 0, single buffered']
    #allocation3 [shape = 's32[1]{0}', space=sflag, size = 0x4, scoped, tag = 'scoped memory for forward.1']
    #allocation4 [shape = 's32[1]{0}', space=sflag, size = 0x4, scoped, tag = 'scoped memory for forward.1']
    #allocation5 [shape = 'u8[196608]{0}', space=vmem, size = 0x30000, scoped, tag = 'input window, operand 1, single buffered']
    #allocation6 [shape = 's32[1]{0}', space=sflag, size = 0x4, scoped, tag = 'scoped memory for forward.1']
    #allocation7 [shape = 'u8[1024]{0}', space=vmem, size = 0x400, scoped, tag = 'output window, operand 0, single buffered']
    %8 = vsyncpa [#allocation3], 0
    %9 = vsyncpa [#allocation6], 0
    %10 = vsyncpa [#allocation4], 0
    // Predicated region
    $region2: #{forward.1} parent=1 // pred_check
      _
    $region3: #{forward.1} parent=1 // pred_check_branch
      %12 = sbr.rel (0) target = $region5
    $region4: #{forward.1} parent=1 // pred_region
      %s14 = ssub.s32 32, 32
      %15 = vsyncadd [#allocation3], %s14
      %s17 = sshll.u32 [#allocation2], 4
      %s18 = int_to_ptr.vmem [resolvable:$true] %s17
      %20 = dma.hbm_to_vmem [thread:$0]  %s0, 32, %s18, [#allocation3]
    $region5: #{forward.1} parent=1 // pred_fallthru
      _
    // Predicated region
    $region6: #{forward.1} parent=1 // pred_check
      _
    $region7: #{forward.1} parent=1 // pred_check_branch
      %22 = sbr.rel (0) target = $region9
    $region8: #{forward.1} parent=1 // pred_region
      %s24 = ssub.s32 6144, 6144
      %25 = vsyncadd [#allocation6], %s24
      %s26 = sshll.u32 [#allocation5], 4
      %s27 = int_to_ptr.vmem [resolvable:$true] %s26
      %32 = dma.hbm_to_vmem [thread:$0]  %s1, 6144, %s27, [#allocation6], 128, 128, 8
    $region9: #{forward.1} parent=1 // pred_fallthru
      _
    // Predicated region
    $region10: #{forward.1} parent=1 // pred_check
      _
    $region11: #{forward.1} parent=1 // pred_check_branch
      %34 = sbr.rel (0) target = $region13
    $region12: #{forward.1} parent=1 // pred_region
      _
    $region13: #{forward.1} parent=1 // pred_fallthru
      _
    // Predicated region
    $region14: #{forward.1} parent=1 // pred_check
      _
    $region15: #{forward.1} parent=1 // pred_check_branch
      %36 = sbr.rel (0) target = $region17
    $region16: #{forward.1} parent=1 // pred_region
      %37 = dma.done [#allocation3], 32
    $region17: #{forward.1} parent=1 // pred_fallthru
      _
    // Predicated region
    $region18: #{forward.1} parent=1 // pred_check
      _
    $region19: #{forward.1} parent=1 // pred_check_branch
      %39 = sbr.rel (0) target = $region21
    $region20: #{forward.1} parent=1 // pred_region
      %40 = dma.done [#allocation6], 6144
    $region21: #{forward.1} parent=1 // pred_fallthru
      _
    %v41 = vld [vmem:[#allocation2] sm:$0x3]
    %v42 = vld [vmem:[#allocation5] sm:$0xff]
    %v43 = vld [vmem:[#allocation5 + $0x8] sm:$0xff]
    %v44 = vld [vmem:[%s2] sm:$0x1]
    %v46 = vlaneseq
    %v47 = vshrl.u32 %v46, 7
    %v48 = vsub.s32 0, %v47
    %v49 = vrot.slane %v44, %v48
    %vm51 = vcmask 130048
    %v53 = vsel %vm51, %v41, 0
    %55 = vmatprep.subr.mxu0 0.0
    %56 = vmatpush1.msra.mxu0 0.0
    %57 = vmatprep.subr.mxu0 0.0
    %58 = vmatpush1.msra.mxu0 0.0
    %59 = vmatprep.subr.mxu0 0.0
    %60 = vmatpush1.msra.mxu0 0.0
    %61 = vmatprep.subr.mxu0 0.0
    %62 = vmatpush1.msra.mxu0 0.0
    %63 = vmatprep.subr.mxu0 0.0
    %64 = vmatpush1.msra.mxu0 0.0
    %65 = vmatprep.subr.mxu0 0.0
    %66 = vmatpush1.msra.mxu0 0.0
    %67 = vmatprep.subr.mxu0 0.0
    %68 = vmatpush1.msra.mxu0 0.0
    %69 = vmatprep.subr.mxu0 0.0
    %70 = vmatpush1.msra.mxu0 0.0
    %71 = vmatprep.subr.mxu0 0.0
    %72 = vmatpush1.msra.mxu0 0.0
    %73 = vmatprep.subr.mxu0 0.0
    %74 = vmatpush1.msra.mxu0 0.0
    %75 = vmatprep.subr.mxu0 0.0
    %76 = vmatpush1.msra.mxu0 0.0
    %77 = vmatprep.subr.mxu0 0.0
    %78 = vmatpush1.msra.mxu0 0.0
    %79 = vmatprep.subr.mxu0 0.0
    %80 = vmatpush1.msra.mxu0 0.0
    %81 = vmatprep.subr.mxu0 0.0
    %82 = vmatpush1.msra.mxu0 0.0
    %83 = vmatprep.subr.mxu0 0.0
    %84 = vmatpush1.msra.mxu0 %v43
    %85 = vmatprep.subr.mxu0 0.0
    %86 = vmatpush1.msra.mxu0 %v42
    %87 = vmatprep.subr.mxu0 0.0
    %88 = vmatpush2.msra.mxu0 0.0
    %89 = vmatprep.subr.mxu0 0.0
    %90 = vmatpush2.msra.mxu0 0.0
    %91 = vmatprep.subr.mxu0 0.0
    %92 = vmatpush2.msra.mxu0 0.0
    %93 = vmatprep.subr.mxu0 0.0
    %94 = vmatpush2.msra.mxu0 0.0
    %95 = vmatprep.subr.mxu0 0.0
    %96 = vmatpush2.msra.mxu0 0.0
    %97 = vmatprep.subr.mxu0 0.0
    %98 = vmatpush2.msra.mxu0 0.0
    %99 = vmatprep.subr.mxu0 0.0
    %100 = vmatpush2.msra.mxu0 0.0
    %101 = vmatprep.subr.mxu0 0.0
    %102 = vmatpush2.msra.mxu0 0.0
    %103 = vmatprep.subr.mxu0 0.0
    %104 = vmatpush2.msra.mxu0 0.0
    %105 = vmatprep.subr.mxu0 0.0
    %106 = vmatpush2.msra.mxu0 0.0
    %107 = vmatprep.subr.mxu0 0.0
    %108 = vmatpush2.msra.mxu0 0.0
    %109 = vmatprep.subr.mxu0 0.0
    %110 = vmatpush2.msra.mxu0 0.0
    %111 = vmatprep.subr.mxu0 0.0
    %112 = vmatpush2.msra.mxu0 0.0
    %113 = vmatprep.subr.mxu0 0.0
    %114 = vmatpush2.msra.mxu0 0.0
    %115 = vmatprep.subr.mxu0 0.0
    %116 = vmatpush2.msra.mxu0 0.0
    %117 = vmatprep.subr.mxu0 0.0
    %118 = vmatpush2.msra.mxu0 0.0
    %119 = vmatprep.mubr.f32.mxu0 0.0
    %120 = vmatmul.mubr.f32.gmra.mxu0 %v53
    %v121 = vpop.f32.mrf.mxu0
    %v122 = vadd.f32 %v49, %v121
    %v123 = vpop.f32.mrf.mxu0
    %124 = vdwg.mxu0
    %v125 = vmax.f32 %v122, 0.0
    %s126 = scalar_lea.vmem [#allocation5], 128
    %v127 = vld [vmem:[%s126] sm:$0xff]
    %v128 = vld [vmem:[%s126 + $0x8] sm:$0xff]
    %v129 = vld [vmem:[%s126 + $0x10] sm:$0xff]
    %v130 = vld [vmem:[%s126 + $0x18] sm:$0xff]
    %v131 = vld [vmem:[%s126 + $0x20] sm:$0xff]
    %v132 = vld [vmem:[%s126 + $0x28] sm:$0xff]
    %v133 = vld [vmem:[%s126 + $0x30] sm:$0xff]
    %v134 = vld [vmem:[%s126 + $0x38] sm:$0xff]
    %v135 = vld [vmem:[%s126 + $0x40] sm:$0xff]
    %v136 = vld [vmem:[%s126 + $0x48] sm:$0xff]
    %v137 = vld [vmem:[%s126 + $0x50] sm:$0xff]
    %v138 = vld [vmem:[%s126 + $0x58] sm:$0xff]
    %v139 = vld [vmem:[%s126 + $0x60] sm:$0xff]
    %v140 = vld [vmem:[%s126 + $0x68] sm:$0xff]
    %v141 = vld [vmem:[%s126 + $0x70] sm:$0xff]
    %v142 = vld [vmem:[%s126 + $0x78] sm:$0xff]
    %s143 = scalar_lea.vmem %s2, 1
    %v144 = vld [vmem:[%s143] sm:$0x1]
    %v146 = vlaneseq
    %v147 = vshrl.u32 %v146, 7
    %v148 = vsub.s32 0, %v147
    %v149 = vrot.slane %v144, %v148
    %151 = vmatprep.subr.mxu0 0.0
    %152 = vmatpush1.msra.mxu0 %v142
    %153 = vmatprep.subr.mxu0 0.0
    %154 = vmatpush1.msra.mxu0 %v141
    %155 = vmatprep.subr.mxu0 0.0
    %156 = vmatpush1.msra.mxu0 %v140
    %157 = vmatprep.subr.mxu0 0.0
    %158 = vmatpush1.msra.mxu0 %v139
    %159 = vmatprep.subr.mxu0 0.0
    %160 = vmatpush1.msra.mxu0 %v138
    %161 = vmatprep.subr.mxu0 0.0
    %162 = vmatpush1.msra.mxu0 %v137
    %163 = vmatprep.subr.mxu0 0.0
    %164 = vmatpush1.msra.mxu0 %v136
    %165 = vmatprep.subr.mxu0 0.0
    %166 = vmatpush1.msra.mxu0 %v135
    %167 = vmatprep.subr.mxu0 0.0
    %168 = vmatpush1.msra.mxu0 %v134
    %169 = vmatprep.subr.mxu0 0.0
    %170 = vmatpush1.msra.mxu0 %v133
    %171 = vmatprep.subr.mxu0 0.0
    %172 = vmatpush1.msra.mxu0 %v132
    %173 = vmatprep.subr.mxu0 0.0
    %174 = vmatpush1.msra.mxu0 %v131
    %175 = vmatprep.subr.mxu0 0.0
    %176 = vmatpush1.msra.mxu0 %v130
    %177 = vmatprep.subr.mxu0 0.0
    %178 = vmatpush1.msra.mxu0 %v129
    %179 = vmatprep.subr.mxu0 0.0
    %180 = vmatpush1.msra.mxu0 %v128
    %181 = vmatprep.subr.mxu0 0.0
    %182 = vmatpush1.msra.mxu0 %v127
    %183 = vmatprep.subr.mxu0 0.0
    %184 = vmatpush2.msra.mxu0 0.0
    %185 = vmatprep.subr.mxu0 0.0
    %186 = vmatpush2.msra.mxu0 0.0
    %187 = vmatprep.subr.mxu0 0.0
    %188 = vmatpush2.msra.mxu0 0.0
    %189 = vmatprep.subr.mxu0 0.0
    %190 = vmatpush2.msra.mxu0 0.0
    %191 = vmatprep.subr.mxu0 0.0
    %192 = vmatpush2.msra.mxu0 0.0
    %193 = vmatprep.subr.mxu0 0.0
    %194 = vmatpush2.msra.mxu0 0.0
    %195 = vmatprep.subr.mxu0 0.0
    %196 = vmatpush2.msra.mxu0 0.0
    %197 = vmatprep.subr.mxu0 0.0
    %198 = vmatpush2.msra.mxu0 0.0
    %199 = vmatprep.subr.mxu0 0.0
    %200 = vmatpush2.msra.mxu0 0.0
    %201 = vmatprep.subr.mxu0 0.0
    %202 = vmatpush2.msra.mxu0 0.0
    %203 = vmatprep.subr.mxu0 0.0
    %204 = vmatpush2.msra.mxu0 0.0
    %205 = vmatprep.subr.mxu0 0.0
    %206 = vmatpush2.msra.mxu0 0.0
    %207 = vmatprep.subr.mxu0 0.0
    %208 = vmatpush2.msra.mxu0 0.0
    %209 = vmatprep.subr.mxu0 0.0
    %210 = vmatpush2.msra.mxu0 0.0
    %211 = vmatprep.subr.mxu0 0.0
    %212 = vmatpush2.msra.mxu0 0.0
    %213 = vmatprep.subr.mxu0 0.0
    %214 = vmatpush2.msra.mxu0 0.0
    %215 = vmatprep.mubr.f32.mxu0 0.0
    %216 = vmatmul.mubr.f32.gmra.mxu0 %v125
    %v217 = vpop.f32.mrf.mxu0
    %v218 = vadd.f32 %v149, %v217
    %v219 = vpop.f32.mrf.mxu0
    %220 = vdwg.mxu0
    %v221 = vmax.f32 %v218, 0.0
    %s222 = scalar_lea.vmem [#allocation5], 256
    %v223 = vld [vmem:[%s222] sm:$0xff]
    %v224 = vld [vmem:[%s222 + $0x8] sm:$0xff]
    %v225 = vld [vmem:[%s222 + $0x10] sm:$0xff]
    %v226 = vld [vmem:[%s222 + $0x18] sm:$0xff]
    %v227 = vld [vmem:[%s222 + $0x20] sm:$0xff]
    %v228 = vld [vmem:[%s222 + $0x28] sm:$0xff]
    %v229 = vld [vmem:[%s222 + $0x30] sm:$0xff]
    %v230 = vld [vmem:[%s222 + $0x38] sm:$0xff]
    %v231 = vld [vmem:[%s222 + $0x40] sm:$0xff]
    %v232 = vld [vmem:[%s222 + $0x48] sm:$0xff]
    %v233 = vld [vmem:[%s222 + $0x50] sm:$0xff]
    %v234 = vld [vmem:[%s222 + $0x58] sm:$0xff]
    %v235 = vld [vmem:[%s222 + $0x60] sm:$0xff]
    %v236 = vld [vmem:[%s222 + $0x68] sm:$0xff]
    %v237 = vld [vmem:[%s222 + $0x70] sm:$0xff]
    %v238 = vld [vmem:[%s222 + $0x78] sm:$0xff]
    %s239 = scalar_lea.vmem %s2, 2
    %v240 = vld [vmem:[%s239] sm:$0x1]
    %v242 = vlaneseq
    %v243 = vshrl.u32 %v242, 7
    %v244 = vsub.s32 0, %v243
    %v245 = vrot.slane %v240, %v244
    %247 = vmatprep.subr.mxu0 0.0
    %248 = vmatpush1.msra.mxu0 %v238
    %249 = vmatprep.subr.mxu0 0.0
    %250 = vmatpush1.msra.mxu0 %v237
    %251 = vmatprep.subr.mxu0 0.0
    %252 = vmatpush1.msra.mxu0 %v236
    %253 = vmatprep.subr.mxu0 0.0
    %254 = vmatpush1.msra.mxu0 %v235
    %255 = vmatprep.subr.mxu0 0.0
    %256 = vmatpush1.msra.mxu0 %v234
    %257 = vmatprep.subr.mxu0 0.0
    %258 = vmatpush1.msra.mxu0 %v233
    %259 = vmatprep.subr.mxu0 0.0
    %260 = vmatpush1.msra.mxu0 %v232
    %261 = vmatprep.subr.mxu0 0.0
    %262 = vmatpush1.msra.mxu0 %v231
    %263 = vmatprep.subr.mxu0 0.0
    %264 = vmatpush1.msra.mxu0 %v230
    %265 = vmatprep.subr.mxu0 0.0
    %266 = vmatpush1.msra.mxu0 %v229
    %267 = vmatprep.subr.mxu0 0.0
    %268 = vmatpush1.msra.mxu0 %v228
    %269 = vmatprep.subr.mxu0 0.0
    %270 = vmatpush1.msra.mxu0 %v227
    %271 = vmatprep.subr.mxu0 0.0
    %272 = vmatpush1.msra.mxu0 %v226
    %273 = vmatprep.subr.mxu0 0.0
    %274 = vmatpush1.msra.mxu0 %v225
    %275 = vmatprep.subr.mxu0 0.0
    %276 = vmatpush1.msra.mxu0 %v224
    %277 = vmatprep.subr.mxu0 0.0
    %278 = vmatpush1.msra.mxu0 %v223
    %279 = vmatprep.subr.mxu0 0.0
    %280 = vmatpush2.msra.mxu0 0.0
    %281 = vmatprep.subr.mxu0 0.0
    %282 = vmatpush2.msra.mxu0 0.0
    %283 = vmatprep.subr.mxu0 0.0
    %284 = vmatpush2.msra.mxu0 0.0
    %285 = vmatprep.subr.mxu0 0.0
    %286 = vmatpush2.msra.mxu0 0.0
    %287 = vmatprep.subr.mxu0 0.0
    %288 = vmatpush2.msra.mxu0 0.0
    %289 = vmatprep.subr.mxu0 0.0
    %290 = vmatpush2.msra.mxu0 0.0
    %291 = vmatprep.subr.mxu0 0.0
    %292 = vmatpush2.msra.mxu0 0.0
    %293 = vmatprep.subr.mxu0 0.0
    %294 = vmatpush2.msra.mxu0 0.0
    %295 = vmatprep.subr.mxu0 0.0
    %296 = vmatpush2.msra.mxu0 0.0
    %297 = vmatprep.subr.mxu0 0.0
    %298 = vmatpush2.msra.mxu0 0.0
    %299 = vmatprep.subr.mxu0 0.0
    %300 = vmatpush2.msra.mxu0 0.0
    %301 = vmatprep.subr.mxu0 0.0
    %302 = vmatpush2.msra.mxu0 0.0
    %303 = vmatprep.subr.mxu0 0.0
    %304 = vmatpush2.msra.mxu0 0.0
    %305 = vmatprep.subr.mxu0 0.0
    %306 = vmatpush2.msra.mxu0 0.0
    %307 = vmatprep.subr.mxu0 0.0
    %308 = vmatpush2.msra.mxu0 0.0
    %309 = vmatprep.subr.mxu0 0.0
    %310 = vmatpush2.msra.mxu0 0.0
    %311 = vmatprep.mubr.f32.mxu0 0.0
    %312 = vmatmul.mubr.f32.gmra.mxu0 %v221
    %v313 = vpop.f32.mrf.mxu0
    %v314 = vadd.f32 %v245, %v313
    %v315 = vpop.f32.mrf.mxu0
    %316 = vdwg.mxu0
    %v317 = vmax.f32 %v314, 0.0
    %vm318 = vcmask 254976
    %319 = vst.msk [vmem:[#allocation7] sm:$0x3] %vm318, %v317
    // Predicated region
    $region22: #{forward.1} parent=1 // pred_check
      _
    $region23: #{forward.1} parent=1 // pred_check_branch
      %321 = sbr.rel (0) target = $region25
    $region24: #{forward.1} parent=1 // pred_region
      %s323 = ssub.s32 32, 32
      %324 = vsyncadd [#allocation4], %s323
      %s326 = sshll.u32 [#allocation7], 4
      %s327 = int_to_ptr.vmem [resolvable:$true] %s326
      %329 = dma.vmem_to_hbm [thread:$0]  %s327, 32, %s3, [#allocation4]
    $region25: #{forward.1} parent=1 // pred_fallthru
      _
    // Predicated region
    $region26: #{forward.1} parent=1 // pred_check
      _
    $region27: #{forward.1} parent=1 // pred_check_branch
      %331 = sbr.rel (0) target = $region29
    $region28: #{forward.1} parent=1 // pred_region
      %332 = dma.done [#allocation4], 32
    $region29: #{forward.1} parent=1 // pred_fallthru
      _
    %333 = vsyncpa [#allocation3], 1
    %334 = vsyncpa [#allocation6], 1
    %335 = vsyncpa [#allocation4], 1

</llo_original>
